<compile_context>
chip_gen: v7x
topology: tpu7x:2x2x1
jax: 0.10.0
libtpu: 0.0.40
codegen_flags: <defaults>
</compile_context>

<pallas_src>
import jax
import jax.numpy as jnp
from jax.experimental import pallas as pl
from jax.experimental.pallas import tpu as pltpu

_LANE = 128
# ~1 MiB per tile: with double-buffered in + out blocks that's ~4 MiB of VMEM,
# comfortably under the scoped limit on every generation (16/32/32 MiB default).
_DEFAULT_TILE_BYTES = 1 << 20


def _copy_kernel(x_ref, o_ref):
    # Identity data movement (only used on the optional "materialize" path).
    o_ref[...] = x_ref[...]


def _tiled_copy_2d(x2d, tile_bytes):
    """Lane-dense tiled copy of a (rows, 128) slab through VMEM."""
    rows, lanes = x2d.shape
    itemsize = jnp.dtype(x2d.dtype).itemsize
    # Rows per tile: ~tile_bytes worth, rounded down to a multiple of 8 (sublane).
    target_rows = max(8, (tile_bytes // (lanes * itemsize)) // 8 * 8)
    tm = rows if rows <= target_rows else target_rows  # full-dim block is exempt
    grid = (pl.cdiv(rows, tm),)
    return pl.pallas_call(
        _copy_kernel,
        out_shape=jax.ShapeDtypeStruct((rows, lanes), x2d.dtype),
        grid=grid,
        in_specs=[pl.BlockSpec((tm, lanes), lambda i: (i, 0))],
        out_specs=pl.BlockSpec((tm, lanes), lambda i: (i, 0)),
        # Donate the input buffer: the "copy" needs no second HBM allocation.
        input_output_aliases={0: 0},
        compiler_params=pltpu.CompilerParams(
            dimension_semantics=("parallel",),      # megacore sharding on v7x
            vmem_limit_bytes=32 * 1024 * 1024,       # explicit, safe on v5e/v6e/v7x
        ),
    )(x2d)


def _small_copy_2d(x2d):
    """Copy a tiny ragged-tail slab; whole-array block, no grid bookkeeping."""
    return pl.pallas_call(
        _copy_kernel,
        out_shape=jax.ShapeDtypeStruct(x2d.shape, x2d.dtype),
    )(x2d)


def _pallas_copy(x, tile_bytes=_DEFAULT_TILE_BYTES):
    """Physically copy `x` through Pallas, lane-dense, preserving shape/dtype."""
    if x.size == 0:
        return x
    orig_shape = x.shape
    flat = x.reshape(-1)
    total = flat.shape[0]
    rows = total // _LANE
    tail = total - rows * _LANE
    pieces = []
    if rows > 0:
        main = _tiled_copy_2d(flat[: rows * _LANE].reshape(rows, _LANE), tile_bytes)
        pieces.append(main.reshape(-1))
    if tail > 0:
        tail_out = _small_copy_2d(flat[rows * _LANE:].reshape(1, tail))
        pieces.append(tail_out.reshape(-1))
    out_flat = pieces[0] if len(pieces) == 1 else jnp.concatenate(pieces)
    return out_flat.reshape(orig_shape)


def _squeeze_target_shape(shape, type_):
    shape = list(shape)
    if type_ > 0:
        # torch.squeeze(dim): removes the dim only if it has size 1, else no-op.
        if type_ < len(shape) and shape[type_] == 1:
            return tuple(shape[:type_] + shape[type_ + 1:])
        return tuple(shape)
    # torch.unsqueeze(dim) with dim = -1 * type_
    dim = -type_
    return tuple(shape[:dim] + [1] + shape[dim:])


def squeeze_forward(x, type_, copy_through_pallas=False,
                    tile_bytes=_DEFAULT_TILE_BYTES):
    """Forward pass of Squeeze(type_).

    Default: metadata-only reshape (zero data movement, matches torch semantics).
    copy_through_pallas=True: additionally materialize via the Pallas copy kernel.
    """
    target = _squeeze_target_shape(x.shape, type_)
    if copy_through_pallas:
        x = _pallas_copy(x, tile_bytes)
    return x.reshape(target)


if __name__ == "__main__":
    key = jax.random.PRNGKey(0)
    k1, k2, k3, k4, k5 = jax.random.split(key, 5)

    # Case 1 (default, metadata-only): type > 0 -> squeeze dim 2 (H == 1).
    x1 = jax.random.normal(k1, (2, 4, 1, 16), dtype=jnp.float32)
    y1 = jax.block_until_ready(squeeze_forward(x1, 2))
    assert y1.shape == (2, 4, 16), y1.shape
    assert jnp.allclose(y1, jnp.squeeze(x1, axis=2))

    # Case 2 (default, metadata-only): type <= 0 -> unsqueeze at dim 3.
    x2 = jax.random.normal(k2, (2, 4, 16), dtype=jnp.float32)
    y2 = jax.block_until_ready(squeeze_forward(x2, -3))
    assert y2.shape == (2, 4, 16, 1), y2.shape
    assert jnp.allclose(y2, jnp.expand_dims(x2, axis=3))

    # Case 3 (Pallas copy path): lane-dense main slab, single tile.
    x3 = jax.random.normal(k3, (2, 4, 16, 16), dtype=jnp.float32)
    y3 = jax.block_until_ready(squeeze_forward(x3, -4, copy_through_pallas=True))
    assert y3.shape == (2, 4, 16, 16, 1), y3.shape
    assert jnp.allclose(y3, jnp.expand_dims(x3, axis=4))

    # Case 4 (Pallas copy path): total < 128 elements -> ragged-tail kernel only.
    x4 = jax.random.normal(k4, (3, 5, 1, 7), dtype=jnp.float32)
    y4 = jax.block_until_ready(squeeze_forward(x4, 2, copy_through_pallas=True))
    assert y4.shape == (3, 5, 7), y4.shape
    assert jnp.allclose(y4, jnp.squeeze(x4, axis=2))

    # Case 5 (Pallas copy path): small tile budget -> multi-tile grid with a
    # partial last block, and a no-op squeeze (dim 1 has size 4, not 1).
    x5 = jax.random.normal(k5, (2, 4, 16, 33), dtype=jnp.float32)
    y5 = jax.block_until_ready(
        squeeze_forward(x5, 1, copy_through_pallas=True, tile_bytes=8 * 1024))
    assert y5.shape == (2, 4, 16, 33), y5.shape
    assert jnp.allclose(y5, x5)

    print("KERNEL_OK")
</pallas_src>

<mosaic_0001>
module attributes {stable_mosaic.version = 11 : i64} {
  func.func @_copy_kernel(%arg0: i32, %arg1: memref<16x128xf32, #tpu.memory_space<vmem>>, %arg2: memref<16x128xf32, #tpu.memory_space<vmem>>) attributes {dimension_semantics = [#tpu.dimension_semantics<parallel>], iteration_bounds = array<i64: 1>, scalar_prefetch = 0 : i64, scratch_operands = 0 : i64, tpu.core_type = #tpu.core_type<tc>, window_params = [{transform_indices = @transform_0, window_bounds = array<i64: 16, 128>}, {transform_indices = @transform_1, window_bounds = array<i64: 16, 128>}]} {
    %c0 = arith.constant 0 : index
    %c0_0 = arith.constant 0 : index
    %0 = vector.load %arg1[%c0, %c0_0] : memref<16x128xf32, #tpu.memory_space<vmem>>, vector<16x128xf32>
    %c0_1 = arith.constant 0 : index
    %c0_2 = arith.constant 0 : index
    %1 = vector.load %arg2[%c0_1, %c0_2] : memref<16x128xf32, #tpu.memory_space<vmem>>, vector<16x128xf32>
    tpu.vector_store %arg2[%c0_1, %c0_2], %0 {strides = array<i32>} : memref<16x128xf32, #tpu.memory_space<vmem>>, vector<16x128xf32>,
    return
  }
  func.func @transform_0(%arg0: i32) -> (i32, i32) {
    %c0_i32 = arith.constant 0 : i32
    %c0_i32_0 = arith.constant 0 : i32
    return %arg0, %c0_i32 : i32, i32
  }
  func.func @transform_1(%arg0: i32) -> (i32, i32) {
    %c0_i32 = arith.constant 0 : i32
    %c0_i32_0 = arith.constant 0 : i32
    return %arg0, %c0_i32 : i32, i32
  }
}

</mosaic_0001>

<llo_original>
// kernel: tpu_custom_call.1
$region0: #{tpu_custom_call.1}
  #allocation0 [shape = 'u32[]', space=smem, size = 0x4, offset = 0x4, fixed_abs, tag = 'smem constant byte address 0x4 - core index']
  #allocation1 [shape = 'u32[144,128]{1,0:T(1,128)}', space=vmem, size = 0x12000, scoped, tag = 'internal scratch']
  %s0 = inlined_call_operand.hbm [shape: f32[16,128], index: 0, kind: input, shape index: {}, may-alias: {0,1}]
  %s1 = inlined_call_operand.hbm [shape: f32[16,128], index: 1, kind: output, shape index: {}, may-alias: {0,1}]
  %s2 = sld [smem:[#allocation0]]
  $region18: #{tpu_custom_call.1} parent=0
    _
  %s4 = ssub.s32 1, %s2
  %s5 = scalar_select 0, %s4, %s2
  $region1: #{tpu_custom_call.1} parent=0
    #allocation2 [shape = 'u8[8192]{0}', space=vmem, size = 0x2000, scoped, tag = 'input window, operand 0, single buffered']
    #allocation3 [shape = 's32[1]{0}', space=sflag, size = 0x4, scoped, tag = 'scoped memory for tpu_custom_call.1']
    #allocation4 [shape = 's32[1]{0}', space=sflag, size = 0x4, scoped, tag = 'scoped memory for tpu_custom_call.1']
    #allocation5 [shape = 'u8[8192]{0}', space=vmem, size = 0x2000, scoped, tag = 'output window, operand 0, single buffered']
    %6 = vsyncpa [#allocation3], 0
    %7 = vsyncpa [#allocation4], 0
    // Predicated region
    $region2: #{tpu_custom_call.1} parent=1 // pred_check
      _
    $region3: #{tpu_custom_call.1} parent=1 // pred_check_branch
      %9 = sbr.rel (0) target = $region5
    $region4: #{tpu_custom_call.1} parent=1 // pred_region
      %s11 = ssub.s32 256, 256
      %12 = vsyncadd [#allocation3], %s11
      %s13 = sshll.u32 [#allocation2], 4
      %s14 = int_to_ptr.vmem [resolvable:$true] %s13
      %19 = dma.hbm_to_vmem [thread:$0]  %s0, 256, %s14, [#allocation3], 128, 128, 8
    $region5: #{tpu_custom_call.1} parent=1 // pred_fallthru
      _
    // Predicated region
    $region6: #{tpu_custom_call.1} parent=1 // pred_check
      _
    $region7: #{tpu_custom_call.1} parent=1 // pred_check_branch
      %21 = sbr.rel (0) target = $region9
    $region8: #{tpu_custom_call.1} parent=1 // pred_region
      %22 = dma.done [#allocation3], 256
    $region9: #{tpu_custom_call.1} parent=1 // pred_fallthru
      _
    %v23 = vld [vmem:[#allocation2] sm:$0xff]
    %v24 = vld [vmem:[#allocation2 + $0x8] sm:$0xff]
    %25 = vst [vmem:[#allocation5] sm:$0xff] %v23
    %26 = vst [vmem:[#allocation5 + $0x8] sm:$0xff] %v24
    // Predicated region
    $region10: #{tpu_custom_call.1} parent=1 // pred_check
      _
    $region11: #{tpu_custom_call.1} parent=1 // pred_check_branch
      %28 = sbr.rel (0) target = $region13
    $region12: #{tpu_custom_call.1} parent=1 // pred_region
      %s30 = ssub.s32 256, 256
      %31 = vsyncadd [#allocation4], %s30
      %s32 = sshll.u32 [#allocation5], 4
      %s33 = int_to_ptr.vmem [resolvable:$true] %s32
      %38 = dma.vmem_to_hbm [thread:$0]  %s33, 256, %s1, [#allocation4], 128, 128, 8
    $region13: #{tpu_custom_call.1} parent=1 // pred_fallthru
      _
    // Predicated region
    $region14: #{tpu_custom_call.1} parent=1 // pred_check
      _
    $region15: #{tpu_custom_call.1} parent=1 // pred_check_branch
      %40 = sbr.rel (0) target = $region17
    $region16: #{tpu_custom_call.1} parent=1 // pred_region
      %41 = dma.done [#allocation4], 256
    $region17: #{tpu_custom_call.1} parent=1 // pred_fallthru
      _
    %42 = vsyncpa [#allocation3], 1
    %43 = vsyncpa [#allocation4], 1

</llo_original>
